<compile_context>
chip_gen: v7x
topology: tpu7x:2x2x1
jax: 0.10.0
libtpu: 0.0.40
codegen_flags: <defaults>
</compile_context>

<pallas_src>
import math
from functools import partial

import jax
import jax.numpy as jnp
from jax.experimental import pallas as pl
from jax.experimental.pallas import tpu as pltpu


def _default_vmem_limit():
    try:
        kind = jax.devices()[0].device_kind.lower()
    except Exception:
        kind = ""
    if ("v4" in kind) or ("v5" in kind) or ("v6" in kind):
        return 96 * 1024 * 1024          # 128 MiB physical VMEM parts
    return 48 * 1024 * 1024              # v7x (64 MiB per TC) / unknown


_VMEM_LIMIT = _default_vmem_limit()
_BIG_VMEM = _VMEM_LIMIT >= 96 * 1024 * 1024


def _pick_tile(dim, max_tile, align):
    """Largest tile <= max_tile that divides `dim` and is `align`-aligned; falls back
    to the full dimension (always a legal block size) so grids divide exactly."""
    if dim <= max_tile:
        return dim
    t = (max_tile // align) * align
    while t >= align:
        if dim % t == 0:
            return t
        t -= align
    return dim


# ----------------------------------------------------------------------------
# Pallas kernel 1: tiled matmul (bf16 MXU / f32 acc), fused bias + SiLU + residual
# ----------------------------------------------------------------------------
def _matmul_kernel(*refs, activation, has_res):
    if has_res:
        a_ref, b_ref, bias_ref, res_ref, o_ref, acc_ref = refs
    else:
        a_ref, b_ref, bias_ref, o_ref, acc_ref = refs
        res_ref = None

    @pl.when(pl.program_id(2) == 0)
    def _init():
        acc_ref[...] = jnp.zeros_like(acc_ref)

    acc_ref[...] += jnp.dot(a_ref[...], b_ref[...],
                            preferred_element_type=jnp.float32)

    @pl.when(pl.program_id(2) == pl.num_programs(2) - 1)
    def _done():
        o = acc_ref[...] + bias_ref[...]
        if activation == "silu":
            o = o * jax.nn.sigmoid(o)
        if res_ref is not None:
            o = o + res_ref[...].astype(jnp.float32)
        o_ref[...] = o.astype(o_ref.dtype)


@partial(jax.jit, static_argnames=("activation",))
def _matmul_core(a, b, bias, residual, *, activation):
    M, K = a.shape
    _, N = b.shape
    tm = _pick_tile(M, 1024 if _BIG_VMEM else 512, 8)
    tk = _pick_tile(K, 512, 128)
    tn = _pick_tile(N, 512, 128)
    has_res = residual is not None
    in_specs = [
        pl.BlockSpec((tm, tk), lambda i, j, k: (i, k)),
        pl.BlockSpec((tk, tn), lambda i, j, k: (k, j)),
        pl.BlockSpec((1, tn), lambda i, j, k: (0, j)),
    ]
    args = [a, b, bias.reshape(1, N)]
    if has_res:
        in_specs.append(pl.BlockSpec((tm, tn), lambda i, j, k: (i, j)))
        args.append(residual)
    return pl.pallas_call(
        partial(_matmul_kernel, activation=activation, has_res=has_res),
        out_shape=jax.ShapeDtypeStruct((M, N), jnp.bfloat16),
        grid_spec=pltpu.PrefetchScalarGridSpec(
            num_scalar_prefetch=0,
            grid=(M // tm, N // tn, K // tk),
            in_specs=in_specs,
            out_specs=pl.BlockSpec((tm, tn), lambda i, j, k: (i, j)),
            scratch_shapes=[pltpu.VMEM((tm, tn), jnp.float32)],
        ),
        compiler_params=pltpu.CompilerParams(
            dimension_semantics=("parallel", "parallel", "arbitrary"),
            vmem_limit_bytes=_VMEM_LIMIT),
    )(*args)


def pallas_matmul(a, b, bias=None, activation=None, residual=None):
    if bias is None:
        bias = jnp.zeros((b.shape[1],), jnp.float32)
    a = a.astype(jnp.bfloat16)
    b = b.astype(jnp.bfloat16)
    bias = bias.astype(jnp.float32)
    if residual is not None:
        residual = residual.astype(jnp.bfloat16)
    return _matmul_core(a, b, bias, residual, activation=activation)


# ----------------------------------------------------------------------------
# Pallas kernel 2: fused GEGLU projection  out = (x@Wa + ba) * gelu(x@Wg + bg)
# ----------------------------------------------------------------------------
def _geglu_kernel(a_ref, wa_ref, wg_ref, ba_ref, bg_ref, o_ref, acc_a, acc_g):
    @pl.when(pl.program_id(2) == 0)
    def _init():
        acc_a[...] = jnp.zeros_like(acc_a)
        acc_g[...] = jnp.zeros_like(acc_g)

    a = a_ref[...]
    acc_a[...] += jnp.dot(a, wa_ref[...], preferred_element_type=jnp.float32)
    acc_g[...] += jnp.dot(a, wg_ref[...], preferred_element_type=jnp.float32)

    @pl.when(pl.program_id(2) == pl.num_programs(2) - 1)
    def _done():
        va = acc_a[...] + ba_ref[...]
        vg = acc_g[...] + bg_ref[...]
        # TODO(synk): tanh-approx GELU in-kernel (avoids erf lowering); ~1e-3 drift vs exact erf GELU.
        o_ref[...] = (va * jax.nn.gelu(vg, approximate=True)).astype(o_ref.dtype)


@jax.jit
def _geglu_core(a, wa, wg, ba, bg):
    M, K = a.shape
    _, N = wa.shape
    tm = _pick_tile(M, 1024 if _BIG_VMEM else 512, 8)
    tk = _pick_tile(K, 512, 128)
    tn = _pick_tile(N, 512, 128)
    return pl.pallas_call(
        _geglu_kernel,
        out_shape=jax.ShapeDtypeStruct((M, N), jnp.bfloat16),
        grid_spec=pltpu.PrefetchScalarGridSpec(
            num_scalar_prefetch=0,
            grid=(M // tm, N // tn, K // tk),
            in_specs=[
                pl.BlockSpec((tm, tk), lambda i, j, k: (i, k)),
                pl.BlockSpec((tk, tn), lambda i, j, k: (k, j)),
                pl.BlockSpec((tk, tn), lambda i, j, k: (k, j)),
                pl.BlockSpec((1, tn), lambda i, j, k: (0, j)),
                pl.BlockSpec((1, tn), lambda i, j, k: (0, j)),
            ],
            out_specs=pl.BlockSpec((tm, tn), lambda i, j, k: (i, j)),
            scratch_shapes=[pltpu.VMEM((tm, tn), jnp.float32),
                            pltpu.VMEM((tm, tn), jnp.float32)],
        ),
        compiler_params=pltpu.CompilerParams(
            dimension_semantics=("parallel", "parallel", "arbitrary"),
            vmem_limit_bytes=_VMEM_LIMIT),
    )(a, wa, wg, ba.reshape(1, N), bg.reshape(1, N))


# ----------------------------------------------------------------------------
# Pallas kernel 3: fused 3x3 convolution (stride 1, pad 1), NHWC, in-kernel halo.
# The image arrives unpadded as (1, H*W, Cin); the kernel zero-fills a flat VMEM
# scratch once per batch element and runs 9 shifted bf16 matmuls over it.  Left/right
# edge wrap-around contributions are masked to zero (== PyTorch zero padding).
# Optional residual input is added in the epilogue (fused skip connections).
# ----------------------------------------------------------------------------
def _conv3x3_kernel(*refs, W, S, has_res):
    if has_res:
        x_ref, w_ref, bias_ref, res_ref, o_ref, pad_ref, acc_ref = refs
    else:
        x_ref, w_ref, bias_ref, o_ref, pad_ref, acc_ref = refs
        res_ref = None
    L = x_ref.shape[1]

    @pl.when(pl.program_id(1) == 0)            # once per batch element (j iterates Cout tiles)
    def _fill():
        pad_ref[...] = jnp.zeros_like(pad_ref)
        pad_ref[pl.ds(S, L), :] = x_ref[0]

    col = jax.lax.broadcasted_iota(jnp.int32, (L, 1), 0) % W
    left_ok = col != 0
    right_ok = col != (W - 1)

    first = True
    for dy in range(3):
        for dx in range(3):
            start = S + (dy - 1) * W + (dx - 1)
            a = pad_ref[pl.ds(start, L), :]
            if dx == 0:
                a = jnp.where(left_ok, a, 0)
            elif dx == 2:
                a = jnp.where(right_ok, a, 0)
            contrib = jnp.dot(a, w_ref[dy * 3 + dx],
                              preferred_element_type=jnp.float32)
            if first:
                acc_ref[...] = contrib
                first = False
            else:
                acc_ref[...] += contrib

    o = acc_ref[...] + bias_ref[...]
    if res_ref is not None:
        o = o + res_ref[0].astype(jnp.float32)
    o_ref[0] = o.astype(o_ref.dtype)


@partial(jax.jit, static_argnames=("W",))
def _conv3x3_core(xf, w9, bias, residual, *, W):
    N, L, Cin = xf.shape
    Cout = w9.shape[2]
    S = ((W + 1 + 15) // 16) * 16               # aligned interior offset (>= W+1)
    FL = S + L + W + 1                          # zero halo above + below
    tco = _pick_tile(Cout, 256, 128)
    has_res = residual is not None
    in_specs = [
        pl.BlockSpec((1, L, Cin), lambda n, j: (n, 0, 0)),
        pl.BlockSpec((9, Cin, tco), lambda n, j: (0, 0, j)),
        pl.BlockSpec((1, tco), lambda n, j: (0, j)),
    ]
    args = [xf, w9, bias.reshape(1, Cout)]
    if has_res:
        in_specs.append(pl.BlockSpec((1, L, tco), lambda n, j: (n, 0, j)))
        args.append(residual)
    return pl.pallas_call(
        partial(_conv3x3_kernel, W=W, S=S, has_res=has_res),
        out_shape=jax.ShapeDtypeStruct((N, L, Cout), jnp.bfloat16),
        grid_spec=pltpu.PrefetchScalarGridSpec(
            num_scalar_prefetch=0,
            grid=(N, Cout // tco),
            in_specs=in_specs,
            out_specs=pl.BlockSpec((1, L, tco), lambda n, j: (n, 0, j)),
            scratch_shapes=[pltpu.VMEM((FL, Cin), jnp.bfloat16),
                            pltpu.VMEM((L, tco), jnp.float32)],
        ),
        compiler_params=pltpu.CompilerParams(
            dimension_semantics=("parallel", "arbitrary"),
            vmem_limit_bytes=_VMEM_LIMIT),
    )(*args)


def conv3x3(x, w9, b, residual=None):
    # TODO(synk): at SD 64x64 scale add an output-row grid axis (with halo re-read) so
    #             the accumulator / out block stays small on v7x's 64 MiB VMEM.
    N, H, W, Cin = x.shape
    Cout = w9.shape[2]
    xf = x.reshape(N, H * W, Cin).astype(jnp.bfloat16)
    resf = None
    if residual is not None:
        resf = residual.reshape(N, H * W, Cout).astype(jnp.bfloat16)
    out = _conv3x3_core(xf, w9, b.astype(jnp.float32), resf, W=W)
    return out.reshape(N, H, W, Cout)


def conv1x1(x, w, b, residual=None):
    N, H, W, Cin = x.shape
    Cout = w.shape[1]
    res = None if residual is None else residual.reshape(N * H * W, Cout)
    y = pallas_matmul(x.reshape(N * H * W, Cin), w, b, residual=res)
    return y.reshape(N, H, W, Cout)


def conv3x3_stride2(x, w9, b):
    # TODO(synk): replace the XLA im2col with a strided-tap Pallas conv (only 3 layers use it).
    N, H, W, cin = x.shape
    cout = w9.shape[2]
    xp = jnp.pad(x.astype(jnp.bfloat16), ((0, 0), (1, 1), (1, 1), (0, 0)))
    Ho, Wo = H // 2, W // 2
    cols = []
    for dy in range(3):
        for dx in range(3):
            cols.append(xp[:, dy:dy + 2 * Ho - 1:2, dx:dx + 2 * Wo - 1:2, :])
    patches = jnp.concatenate(cols, axis=-1)
    y = pallas_matmul(patches.reshape(N * Ho * Wo, 9 * cin),
                      w9.reshape(9 * cin, cout), b)
    return y.reshape(N, Ho, Wo, cout)


# ----------------------------------------------------------------------------
# Pallas kernel 4: fused GroupNorm (32 groups) + optional SiLU + optional fused
# per-batch channel bias (time-embedding add), NHWC.  Stats in f32, two-pass.
# ----------------------------------------------------------------------------
def _gn_kernel(*refs, inv_n, eps, silu, has_bias):
    if has_bias:
        x_ref, g_ref, b_ref, oh_ref, oht_ref, e_ref, o_ref = refs
    else:
        x_ref, g_ref, b_ref, oh_ref, oht_ref, o_ref = refs
        e_ref = None
    x = x_ref[0].astype(jnp.float32)
    if e_ref is not None:
        x = x + e_ref[...].astype(jnp.float32)
    mean_g = jnp.dot(jnp.sum(x, axis=0, keepdims=True), oh_ref[...],
                     preferred_element_type=jnp.float32) * inv_n
    mean_c = jnp.dot(mean_g, oht_ref[...], preferred_element_type=jnp.float32)
    xc = x - mean_c
    var_g = jnp.dot(jnp.sum(xc * xc, axis=0, keepdims=True), oh_ref[...],
                    preferred_element_type=jnp.float32) * inv_n
    rstd_c = jnp.dot(jax.lax.rsqrt(var_g + eps), oht_ref[...],
                     preferred_element_type=jnp.float32)
    y = xc * rstd_c * g_ref[...] + b_ref[...]
    if silu:
        y = y * jax.nn.sigmoid(y)
    o_ref[0] = y.astype(o_ref.dtype)


@partial(jax.jit, static_argnames=("num_groups", "eps", "silu"))
def _group_norm_core(x2, gamma, beta, bias, *, num_groups, eps, silu):
    N, HW, C = x2.shape
    G = num_groups
    cg = C // G
    oh = (jnp.arange(C)[:, None] // cg == jnp.arange(G)[None, :]).astype(jnp.float32)
    inv_n = 1.0 / float(HW * cg)
    has_bias = bias is not None
    in_specs = [
        pl.BlockSpec((1, HW, C), lambda n: (n, 0, 0)),
        pl.BlockSpec((1, C), lambda n: (0, 0)),
        pl.BlockSpec((1, C), lambda n: (0, 0)),
        pl.BlockSpec((C, G), lambda n: (0, 0)),
        pl.BlockSpec((G, C), lambda n: (0, 0)),
    ]
    args = [x2, gamma.reshape(1, C), beta.reshape(1, C), oh, oh.T]
    if has_bias:
        in_specs.append(pl.BlockSpec((1, C), lambda n: (n, 0)))
        args.append(bias)
    return pl.pallas_call(
        partial(_gn_kernel, inv_n=inv_n, eps=eps, silu=silu, has_bias=has_bias),
        out_shape=jax.ShapeDtypeStruct((N, HW, C), jnp.bfloat16),
        grid_spec=pltpu.PrefetchScalarGridSpec(
            num_scalar_prefetch=0,
            grid=(N,),
            in_specs=in_specs,
            out_specs=pl.BlockSpec((1, HW, C), lambda n: (n, 0, 0)),
        ),
        compiler_params=pltpu.CompilerParams(
            dimension_semantics=("parallel",),
            vmem_limit_bytes=_VMEM_LIMIT),
    )(*args)


def group_norm(x, gamma, beta, num_groups=32, eps=1e-5, silu=False, bias=None):
    # TODO(synk): HW-tiled stats + normalize split for SD 64x64 decoder widths on v7x.
    N, H, W, C = x.shape
    b2 = None if bias is None else bias.astype(jnp.bfloat16).reshape(N, C)
    out = _group_norm_core(x.reshape(N, H * W, C).astype(jnp.bfloat16),
                           gamma.astype(jnp.float32), beta.astype(jnp.float32), b2,
                           num_groups=num_groups, eps=eps, silu=silu)
    return out.reshape(N, H, W, C)


# ----------------------------------------------------------------------------
# Pallas kernel 5: LayerNorm, row-tiled over (B*S, C)
# ----------------------------------------------------------------------------
def _ln_kernel(x_ref, g_ref, b_ref, o_ref, *, eps):
    x = x_ref[...].astype(jnp.float32)
    mean = jnp.mean(x, axis=-1, keepdims=True)
    xc = x - mean
    var = jnp.mean(xc * xc, axis=-1, keepdims=True)
    y = xc * jax.lax.rsqrt(var + eps) * g_ref[...] + b_ref[...]
    o_ref[...] = y.astype(o_ref.dtype)


@partial(jax.jit, static_argnames=("eps",))
def _layer_norm_core(x2, gamma, beta, *, eps):
    R, C = x2.shape
    tr = _pick_tile(R, 512, 8)
    return pl.pallas_call(
        partial(_ln_kernel, eps=eps),
        out_shape=jax.ShapeDtypeStruct((R, C), jnp.bfloat16),
        grid_spec=pltpu.PrefetchScalarGridSpec(
            num_scalar_prefetch=0,
            grid=(R // tr,),
            in_specs=[
                pl.BlockSpec((tr, C), lambda i: (i, 0)),
                pl.BlockSpec((1, C), lambda i: (0, 0)),
                pl.BlockSpec((1, C), lambda i: (0, 0)),
            ],
            out_specs=pl.BlockSpec((tr, C), lambda i: (i, 0)),
        ),
        compiler_params=pltpu.CompilerParams(
            dimension_semantics=("parallel",),
            vmem_limit_bytes=_VMEM_LIMIT),
    )(x2, gamma.reshape(1, C), beta.reshape(1, C))


def layer_norm(x, gamma, beta, eps=1e-5):
    B, S, C = x.shape
    return _layer_norm_core(x.reshape(B * S, C).astype(jnp.bfloat16),
                            gamma.astype(jnp.float32), beta.astype(jnp.float32),
                            eps=eps).reshape(B, S, C)


# ----------------------------------------------------------------------------
# Pallas kernel 6: flash-style multi-head attention (Q-tiled + KV-tiled online
# softmax); all heads packed lane-dense as (tile, heads*dh), 1/sqrt(dh) folded
# into the Q projection weights, per-head slice writes in the epilogue.
# ----------------------------------------------------------------------------
def _attn_kernel(q_ref, k_ref, v_ref, o_ref, m_sc, l_sc, acc_sc, *, heads, dh):
    kv = pl.program_id(2)

    @pl.when(kv == 0)
    def _init():
        m_sc[...] = jnp.full_like(m_sc, -1e30)
        l_sc[...] = jnp.zeros_like(l_sc)
        acc_sc[...] = jnp.zeros_like(acc_sc)

    q = q_ref[0]
    k = k_ref[0]
    v = v_ref[0]
    # TODO(synk): per-head K=dh matmuls under-fill the 256-deep MXU on v6e/v7x; a
    #             head-batched dot_general (with an in-kernel Q restage) is the next step.
    for h in range(heads):
        qh = q[:, h * dh:(h + 1) * dh]
        kh = k[:, h * dh:(h + 1) * dh]
        vh = v[:, h * dh:(h + 1) * dh]
        s = jax.lax.dot_general(qh, kh, (((1,), (1,)), ((), ())),
                                preferred_element_type=jnp.float32)
        m_prev = m_sc[h]
        m_new = jnp.maximum(m_prev, jnp.max(s, axis=-1, keepdims=True))
        alpha = jnp.exp(m_prev - m_new)
        p = jnp.exp(s - m_new)
        l_sc[h] = alpha * l_sc[h] + jnp.sum(p, axis=-1, keepdims=True)
        acc_sc[h] = alpha * acc_sc[h] + jnp.dot(p.astype(jnp.bfloat16), vh,
                                                preferred_element_type=jnp.float32)
        m_sc[h] = m_new

    @pl.when(kv == pl.num_programs(2) - 1)
    def _done():
        for h in range(heads):
            o = acc_sc[h] * pl.reciprocal(l_sc[h], approx=True)
            o_ref[0, :, pl.ds(h * dh, dh)] = o.astype(o_ref.dtype)


@partial(jax.jit, static_argnames=("heads",))
def _attn_core(q, k, v, *, heads):
    B, Sq, C = q.shape
    _, Sk, _ = k.shape
    dh = C // heads
    tq = _pick_tile(Sq, 512, 8)
    if Sk % 256 == 0:
        tkv = 256
    elif Sk % 128 == 0:
        tkv = 128
    else:
        tkv = Sk
    return pl.pallas_call(
        partial(_attn_kernel, heads=heads, dh=dh),
        out_shape=jax.ShapeDtypeStruct((B, Sq, C), jnp.bfloat16),
        grid_spec=pltpu.PrefetchScalarGridSpec(
            num_scalar_prefetch=0,
            grid=(B, Sq // tq, Sk // tkv),
            in_specs=[
                pl.BlockSpec((1, tq, C), lambda b, i, j: (b, i, 0)),
                pl.BlockSpec((1, tkv, C), lambda b, i, j: (b, j, 0)),
                pl.BlockSpec((1, tkv, C), lambda b, i, j: (b, j, 0)),
            ],
            out_specs=pl.BlockSpec((1, tq, C), lambda b, i, j: (b, i, 0)),
            scratch_shapes=[pltpu.VMEM((heads, tq, 1), jnp.float32),
                            pltpu.VMEM((heads, tq, 1), jnp.float32),
                            pltpu.VMEM((heads, tq, dh), jnp.float32)],
        ),
        compiler_params=pltpu.CompilerParams(
            dimension_semantics=("parallel", "parallel", "arbitrary"),
            vmem_limit_bytes=_VMEM_LIMIT),
    )(q, k, v)


# ----------------------------------------------------------------------------
# UNet sub-modules (forward semantics mirror the PyTorch module)
# ----------------------------------------------------------------------------
def cross_attention(x, context, p, heads, residual):
    B, S, C = x.shape
    ctx = x if context is None else context
    _, Sc, Cc = ctx.shape
    inner = p["wq"].shape[1]
    q = pallas_matmul(x.reshape(B * S, C), p["wq"]).reshape(B, S, inner)
    k = pallas_matmul(ctx.reshape(B * Sc, Cc), p["wk"]).reshape(B, Sc, inner)
    v = pallas_matmul(ctx.reshape(B * Sc, Cc), p["wv"]).reshape(B, Sc, inner)
    o = _attn_core(q, k, v, heads=heads)
    return pallas_matmul(o.reshape(B * S, inner), p["wo"], p["bo"],
                         residual=residual.reshape(B * S, C)).reshape(B, S, C)


def feed_forward(x, p, residual):
    B, S, C = x.shape
    h = _geglu_core(x.reshape(B * S, C).astype(jnp.bfloat16),
                    p["wa"], p["wg"], p["ba"], p["bg"])
    return pallas_matmul(h, p["w2"], p["b2"],
                         residual=residual.reshape(B * S, C)).reshape(B, S, C)


def transformer_block(x, context, p, heads):
    x = cross_attention(layer_norm(x, p["ln1_g"], p["ln1_b"]), None,
                        p["attn1"], heads, residual=x)
    x = cross_attention(layer_norm(x, p["ln2_g"], p["ln2_b"]), context,
                        p["attn2"], heads, residual=x)
    x = feed_forward(layer_norm(x, p["ln3_g"], p["ln3_b"]), p["ff"], residual=x)
    return x


def spatial_transformer(x, context, p):
    N, H, W, C = x.shape
    x_in = x
    h = group_norm(x, p["norm_g"], p["norm_b"], eps=1e-6, silu=False)
    h = conv1x1(h, p["proj_in_w"], p["proj_in_b"])
    h = h.reshape(N, H * W, C)
    for bp in p["blocks"]:
        h = transformer_block(h, context, bp, p["heads"])
    h = h.reshape(N, H, W, C)
    return conv1x1(h, p["proj_out_w"], p["proj_out_b"], residual=x_in)


def resblock(x, emb_s, p):
    h = group_norm(x, p["gn1_g"], p["gn1_b"], silu=True)
    h = conv3x3(h, p["conv1_w"], p["conv1_b"])
    emb_out = pallas_matmul(emb_s, p["emb_w"], p["emb_b"])        # (N, Cout)
    # fused: (h + emb_out) -> GroupNorm -> SiLU, all in one kernel
    h = group_norm(h, p["gn2_g"], p["gn2_b"], silu=True, bias=emb_out)
    if p["skip_w"] is None:
        return conv3x3(h, p["conv2_w"], p["conv2_b"], residual=x)     # fused skip add
    h = conv3x3(h, p["conv2_w"], p["conv2_b"])
    return conv1x1(x, p["skip_w"], p["skip_b"], residual=h)           # fused skip add


def run_block(h, layers, emb_s, context):
    for kind, p in layers:
        if kind == "conv":
            h = conv3x3(h, p["w"], p["b"])
        elif kind == "res":
            h = resblock(h, emb_s, p)
        elif kind == "st":
            h = spatial_transformer(h, context, p)
        elif kind == "down":
            h = conv3x3_stride2(h, p["w"], p["b"])
        elif kind == "up":
            # TODO(synk): fold the nearest-2x upsample into the following conv's input DMA.
            h = jnp.repeat(jnp.repeat(h, 2, axis=1), 2, axis=2)
            h = conv3x3(h, p["w"], p["b"])
    return h


def timestep_embedding(timesteps, dim, max_period=10000):
    half = dim // 2
    freqs = jnp.exp(-math.log(max_period) *
                    jnp.arange(half, dtype=jnp.float32) / half)
    args = timesteps.astype(jnp.float32)[:, None] * freqs[None]
    return jnp.concatenate([jnp.cos(args), jnp.sin(args)], axis=-1)


def unet_forward(params, x_nchw, timesteps, context, model_ch):
    # NCHW in -> NHWC bf16 compute -> NCHW f32 out
    x = jnp.transpose(x_nchw, (0, 2, 3, 1)).astype(jnp.bfloat16)
    context = context.astype(jnp.bfloat16)
    te = params["time_embed"]
    t_emb = timestep_embedding(timesteps, model_ch)
    # emb_s = SiLU(time_embed(t_emb)); every resblock's emb_layers = [SiLU, Linear]
    # consumes emb_s directly (both SiLUs fused into the matmul epilogues).
    h1 = pallas_matmul(t_emb, te["w1"], te["b1"], activation="silu")
    emb_s = pallas_matmul(h1, te["w2"], te["b2"], activation="silu")

    hs = []
    h = x
    for layers in params["input_blocks"]:
        h = run_block(h, layers, emb_s, context)
        hs.append(h)
    h = run_block(h, params["middle"], emb_s, context)
    for layers in params["output_blocks"]:
        # TODO(synk): fuse the skip concat into the next resblock's GN/conv as two K segments.
        h = jnp.concatenate([h, hs.pop()], axis=-1)       # torch.cat([h, skip], dim=1)
        h = run_block(h, layers, emb_s, context)
    po = params["out"]
    h = group_norm(h, po["gn_g"], po["gn_b"], silu=True)
    h = conv3x3(h, po["w"], po["b"])
    return jnp.transpose(h.astype(jnp.float32), (0, 3, 1, 2))


# ----------------------------------------------------------------------------
# Deterministic parameter construction mirroring UNetModel.__init__
# (3x3 conv weights stored as (9, Cin, Cout) bf16; 1x1/dense weights as (Din, Dout) bf16)
# ----------------------------------------------------------------------------
class Init:
    def __init__(self, seed):
        self._key = jax.random.PRNGKey(seed)

    def _next(self):
        self._key, k = jax.random.split(self._key)
        return k

    def conv3(self, cin, cout):
        w = jax.random.normal(self._next(), (9, cin, cout), jnp.float32)
        w = w * (1.0 / math.sqrt(9 * cin))
        return w.astype(jnp.bfloat16), jnp.zeros((cout,), jnp.float32)

    def conv1(self, cin, cout):
        w = jax.random.normal(self._next(), (cin, cout), jnp.float32)
        w = w * (1.0 / math.sqrt(cin))
        return w.astype(jnp.bfloat16), jnp.zeros((cout,), jnp.float32)

    def dense(self, din, dout):
        w = jax.random.normal(self._next(), (din, dout), jnp.float32)
        w = w * (1.0 / math.sqrt(din))
        return w.astype(jnp.bfloat16), jnp.zeros((dout,), jnp.float32)

    def dense_nobias(self, din, dout, scale=1.0):
        w = jax.random.normal(self._next(), (din, dout), jnp.float32)
        return (w * (scale / math.sqrt(din))).astype(jnp.bfloat16)


def res_params(init, cin, cout, emb_dim):
    conv1_w, conv1_b = init.conv3(cin, cout)
    emb_w, emb_b = init.dense(emb_dim, cout)
    conv2_w, conv2_b = init.conv3(cout, cout)
    # TODO(synk): zero_module conv2 is randomly initialized so the kernels exercise a real path.
    p = dict(gn1_g=jnp.ones((cin,)), gn1_b=jnp.zeros((cin,)),
             conv1_w=conv1_w, conv1_b=conv1_b, emb_w=emb_w, emb_b=emb_b,
             gn2_g=jnp.ones((cout,)), gn2_b=jnp.zeros((cout,)),
             conv2_w=conv2_w, conv2_b=conv2_b)
    if cin == cout:
        p["skip_w"], p["skip_b"] = None, None
    else:
        p["skip_w"], p["skip_b"] = init.conv1(cin, cout)
    return p


def attn_params(init, qdim, kdim, inner, d_head):
    wo, bo = init.dense(inner, qdim)
    # fold the 1/sqrt(d_head) attention scale into the Q projection weights
    return dict(wq=init.dense_nobias(qdim, inner, scale=1.0 / math.sqrt(d_head)),
                wk=init.dense_nobias(kdim, inner),
                wv=init.dense_nobias(kdim, inner),
                wo=wo, bo=bo)


def st_params(init, c, heads, d_head, ctx_dim, depth=1):
    inner = heads * d_head
    blocks = []
    for _ in range(depth):
        wa, ba = init.dense(c, 4 * c)            # GEGLU value stream
        wg, bg = init.dense(c, 4 * c)            # GEGLU gate stream
        w2, b2 = init.dense(4 * c, c)
        blocks.append(dict(
            ln1_g=jnp.ones((c,)), ln1_b=jnp.zeros((c,)),
            attn1=attn_params(init, c, c, inner, d_head),
            ln2_g=jnp.ones((c,)), ln2_b=jnp.zeros((c,)),
            attn2=attn_params(init, c, ctx_dim, inner, d_head),
            ln3_g=jnp.ones((c,)), ln3_b=jnp.zeros((c,)),
            ff=dict(wa=wa, ba=ba, wg=wg, bg=bg, w2=w2, b2=b2)))
    pi_w, pi_b = init.conv1(c, inner)
    po_w, po_b = init.conv1(inner, c)
    return dict(norm_g=jnp.ones((c,)), norm_b=jnp.zeros((c,)),
                proj_in_w=pi_w, proj_in_b=pi_b, blocks=blocks,
                proj_out_w=po_w, proj_out_b=po_b, heads=heads)


def build_unet_params(seed, model_ch, channel_mult, num_res_blocks,
                      attention_resolutions, num_heads, ctx_dim,
                      in_ch=4, out_ch=4):
    init = Init(seed)
    emb_dim = model_ch * 4
    params = {}
    w1, b1 = init.dense(model_ch, emb_dim)
    w2, b2 = init.dense(emb_dim, emb_dim)
    params["time_embed"] = dict(w1=w1, b1=b1, w2=w2, b2=b2)

    input_blocks = []
    cw, cb = init.conv3(in_ch, model_ch)
    input_blocks.append([("conv", dict(w=cw, b=cb))])
    chans = [model_ch]
    ch, ds = model_ch, 1
    for level, mult in enumerate(channel_mult):
        for _ in range(num_res_blocks):
            layers = [("res", res_params(init, ch, mult * model_ch, emb_dim))]
            ch = mult * model_ch
            if ds in attention_resolutions:
                layers.append(("st", st_params(init, ch, num_heads,
                                               ch // num_heads, ctx_dim)))
            input_blocks.append(layers)
            chans.append(ch)
        if level != len(channel_mult) - 1:
            dw, db = init.conv3(ch, ch)
            input_blocks.append([("down", dict(w=dw, b=db))])
            chans.append(ch)
            ds *= 2
    params["input_blocks"] = input_blocks

    params["middle"] = [("res", res_params(init, ch, ch, emb_dim)),
                        ("st", st_params(init, ch, num_heads,
                                         ch // num_heads, ctx_dim)),
                        ("res", res_params(init, ch, ch, emb_dim))]

    output_blocks = []
    for level, mult in list(enumerate(channel_mult))[::-1]:
        for i in range(num_res_blocks + 1):
            ich = chans.pop()
            layers = [("res", res_params(init, ch + ich, model_ch * mult, emb_dim))]
            ch = model_ch * mult
            if ds in attention_resolutions:
                layers.append(("st", st_params(init, ch, num_heads,
                                               ch // num_heads, ctx_dim)))
            if level and i == num_res_blocks:
                uw, ub = init.conv3(ch, ch)
                layers.append(("up", dict(w=uw, b=ub)))
                ds //= 2
            output_blocks.append(layers)
    params["output_blocks"] = output_blocks

    ow, ob = init.conv3(model_ch, out_ch)
    params["out"] = dict(gn_g=jnp.ones((model_ch,)), gn_b=jnp.zeros((model_ch,)),
                         w=ow, b=ob)
    return params


# ----------------------------------------------------------------------------
if __name__ == "__main__":
    # Scaled-down demo configuration (set MODEL_CH=320, CTX_DIM=768 for real SD size).
    MODEL_CH = 64
    CTX_DIM = 64
    NUM_HEADS = 8
    CHANNEL_MULT = [1, 2, 4, 4]
    NUM_RES_BLOCKS = 2
    ATTN_RES = [4, 2, 1]

    B, C_IN, SP = 2, 4, 16
    CTX_SEQ = 16

    key = jax.random.PRNGKey(0)
    kx, kc = jax.random.split(key, 2)
    x = jax.random.normal(kx, (B, C_IN, SP, SP), jnp.float32)        # NCHW like torch
    timesteps = jnp.array([1.0, 37.0], jnp.float32)
    context = jax.random.normal(kc, (B, CTX_SEQ, CTX_DIM), jnp.float32)

    params = build_unet_params(0, MODEL_CH, CHANNEL_MULT, NUM_RES_BLOCKS,
                               ATTN_RES, NUM_HEADS, CTX_DIM,
                               in_ch=C_IN, out_ch=4)

    out = unet_forward(params, x, timesteps, context, MODEL_CH)
    out = jax.block_until_ready(out)

    assert out.shape == (B, 4, SP, SP), out.shape
    assert bool(jnp.all(jnp.isfinite(out)))
    print("KERNEL_OK")
</pallas_src>

<mosaic_0001>
module attributes {stable_mosaic.version = 11 : i64} {
  func.func @_matmul_kernel(%arg0: i32, %arg1: i32, %arg2: i32, %arg3: memref<2x64xbf16, #tpu.memory_space<vmem>>, %arg4: memref<64x256xbf16, #tpu.memory_space<vmem>>, %arg5: memref<1x256xf32, #tpu.memory_space<vmem>>, %arg6: memref<2x256xbf16, #tpu.memory_space<vmem>>, %arg7: memref<2x256xf32, #tpu.memory_space<vmem>>) attributes {dimension_semantics = [#tpu.dimension_semantics<parallel>, #tpu.dimension_semantics<parallel>, #tpu.dimension_semantics<arbitrary>], iteration_bounds = array<i64: 1, 1, 1>, scalar_prefetch = 0 : i64, scratch_operands = 1 : i64, tpu.core_type = #tpu.core_type<tc>, window_params = [{transform_indices = @transform_0, window_bounds = array<i64: 2, 64>}, {transform_indices = @transform_1, window_bounds = array<i64: 64, 256>}, {transform_indices = @transform_2, window_bounds = array<i64: 1, 256>}, {transform_indices = @transform_3, window_bounds = array<i64: 2, 256>}]} {
    %c0_i32 = arith.constant 0 : i32
    %0 = arith.cmpi eq, %arg2, %c0_i32 : i32
    %1 = arith.extui %0 : i1 to i32
    %c0_i32_0 = arith.constant 0 : i32
    %2 = arith.cmpi ne, %1, %c0_i32_0 : i32
    scf.if %2 {
      %cst_10 = arith.constant 0.000000e+00 : f32
      %12 = vector.broadcast %cst_10 : f32 to vector<2x256xf32>
      %c0_11 = arith.constant 0 : index
      %c0_12 = arith.constant 0 : index
      %13 = vector.load %arg7[%c0_11, %c0_12] : memref<2x256xf32, #tpu.memory_space<vmem>>, vector<2x256xf32>
      tpu.vector_store %arg7[%c0_11, %c0_12], %12 {strides = array<i32>} : memref<2x256xf32, #tpu.memory_space<vmem>>, vector<2x256xf32>,
    } else {
    }
    %c0 = arith.constant 0 : index
    %c0_1 = arith.constant 0 : index
    %3 = vector.load %arg7[%c0, %c0_1] : memref<2x256xf32, #tpu.memory_space<vmem>>, vector<2x256xf32>
    %c0_2 = arith.constant 0 : index
    %c0_3 = arith.constant 0 : index
    %4 = vector.load %arg3[%c0_2, %c0_3] : memref<2x64xbf16, #tpu.memory_space<vmem>>, vector<2x64xbf16>
    %c0_4 = arith.constant 0 : index
    %c0_5 = arith.constant 0 : index
    %5 = vector.load %arg4[%c0_4, %c0_5] : memref<64x256xbf16, #tpu.memory_space<vmem>>, vector<64x256xbf16>
    %cst = arith.constant dense<0.000000e+00> : vector<2x256xf32>
    %6 = tpu.matmul %4, %5, %cst {dimension_numbers = #tpu.dot_dimension_numbers<[1], [0], [0], [1], [0, 0, 1, 1], [], []>} : vector<2x64xbf16>, vector<64x256xbf16>, vector<2x256xf32> -> vector<2x256xf32>
    %7 = arith.addf %3, %6 : vector<2x256xf32>
    %c0_6 = arith.constant 0 : index
    %c0_7 = arith.constant 0 : index
    %8 = vector.load %arg7[%c0_6, %c0_7] : memref<2x256xf32, #tpu.memory_space<vmem>>, vector<2x256xf32>
    tpu.vector_store %arg7[%c0_6, %c0_7], %7 {strides = array<i32>} : memref<2x256xf32, #tpu.memory_space<vmem>>, vector<2x256xf32>,
    %c0_i32_8 = arith.constant 0 : i32
    %9 = arith.cmpi eq, %arg2, %c0_i32_8 : i32
    %10 = arith.extui %9 : i1 to i32
    %c0_i32_9 = arith.constant 0 : i32
    %11 = arith.cmpi ne, %10, %c0_i32_9 : i32
    scf.if %11 {
      %c0_10 = arith.constant 0 : index
      %c0_11 = arith.constant 0 : index
      %12 = vector.load %arg7[%c0_10, %c0_11] : memref<2x256xf32, #tpu.memory_space<vmem>>, vector<2x256xf32>
      %c0_12 = arith.constant 0 : index
      %c0_13 = arith.constant 0 : index
      %13 = vector.load %arg5[%c0_12, %c0_13] : memref<1x256xf32, #tpu.memory_space<vmem>>, vector<1x256xf32>
      %14 = vector.broadcast %13 : vector<1x256xf32> to vector<2x256xf32>
      %15 = arith.addf %12, %14 : vector<2x256xf32>
      %16 = arith.negf %15 : vector<2x256xf32>
      %17 = math.exp %16 : vector<2x256xf32>
      %cst_14 = arith.constant 1.000000e+00 : f32
      %18 = vector.broadcast %cst_14 : f32 to vector<2x256xf32>
      %19 = arith.addf %18, %17 : vector<2x256xf32>
      %20 = arith.divf %18, %19 : vector<2x256xf32>
      %21 = arith.mulf %15, %20 : vector<2x256xf32>
      %22 = arith.truncf %21 : vector<2x256xf32> to vector<2x256xbf16>
      %c0_15 = arith.constant 0 : index
      %c0_16 = arith.constant 0 : index
      %23 = vector.load %arg6[%c0_15, %c0_16] : memref<2x256xbf16, #tpu.memory_space<vmem>>, vector<2x256xbf16>
      tpu.vector_store %arg6[%c0_15, %c0_16], %22 {strides = array<i32>} : memref<2x256xbf16, #tpu.memory_space<vmem>>, vector<2x256xbf16>,
    } else {
    }
    return
  }
  func.func @transform_0(%arg0: i32, %arg1: i32, %arg2: i32) -> (i32, i32) {
    %c0_i32 = arith.constant 0 : i32
    return %arg0, %arg2 : i32, i32
  }
  func.func @transform_1(%arg0: i32, %arg1: i32, %arg2: i32) -> (i32, i32) {
    %c0_i32 = arith.constant 0 : i32
    return %arg2, %arg1 : i32, i32
  }
  func.func @transform_2(%arg0: i32, %arg1: i32, %arg2: i32) -> (i32, i32) {
    %c0_i32 = arith.constant 0 : i32
    %c0_i32_0 = arith.constant 0 : i32
    return %c0_i32, %arg1 : i32, i32
  }
  func.func @transform_3(%arg0: i32, %arg1: i32, %arg2: i32) -> (i32, i32) {
    %c0_i32 = arith.constant 0 : i32
    return %arg0, %arg1 : i32, i32
  }
}

</mosaic_0001>

<llo_original>
// kernel: _matmul_core.1
$region0: #{_matmul_core.1}
  #allocation0 [shape = 'u32[]', space=smem, size = 0x4, offset = 0x4, fixed_abs, tag = 'smem constant byte address 0x4 - core index']
  #allocation1 [shape = 'u32[144,128]{1,0:T(1,128)}', space=vmem, size = 0x12000, scoped, tag = 'internal scratch']
  #allocation2 [shape = 'f32[2,256]{1,0:T(2,128)}', space=vmem, size = 0x800, scoped, tag = 'scratch operand']
  %s0 = inlined_call_operand.vmem [shape: bf16[2,64], index: 0, kind: input, shape index: {}]
  %s1 = inlined_call_operand.hbm [shape: bf16[64,256], index: 1, kind: input, shape index: {}]
  %s2 = inlined_call_operand.vmem [shape: f32[1,256], index: 2, kind: input, shape index: {}]
  %s3 = inlined_call_operand.hbm [shape: bf16[2,256], index: 3, kind: output, shape index: {}]
  %s4 = sld [smem:[#allocation0]]
  $region34: #{_matmul_core.1} parent=0
    _
  %s6 = ssub.s32 1, %s4
  %s7 = scalar_select 0, %s6, %s4
  $region1: #{_matmul_core.1} parent=0
    #allocation3 [shape = 'u8[32768]{0}', space=vmem, size = 0x8000, scoped, tag = 'input window, operand 1, single buffered']
    #allocation4 [shape = 's32[1]{0}', space=sflag, size = 0x4, scoped, tag = 'scoped memory for _matmul_core.1']
    #allocation5 [shape = 's32[1]{0}', space=sflag, size = 0x4, scoped, tag = 'scoped memory for _matmul_core.1']
    #allocation6 [shape = 'u8[1024]{0}', space=vmem, size = 0x400, scoped, tag = 'output window, operand 0, single buffered']
    %8 = vsyncpa [#allocation4], 0
    %9 = vsyncpa [#allocation5], 0
    // Predicated region
    $region2: #{_matmul_core.1} parent=1 // pred_check
      _
    $region3: #{_matmul_core.1} parent=1 // pred_check_branch
      %11 = sbr.rel (0) target = $region5
    $region4: #{_matmul_core.1} parent=1 // pred_region
      _
    $region5: #{_matmul_core.1} parent=1 // pred_fallthru
      _
    // Predicated region
    $region6: #{_matmul_core.1} parent=1 // pred_check
      _
    $region7: #{_matmul_core.1} parent=1 // pred_check_branch
      %13 = sbr.rel (0) target = $region9
    $region8: #{_matmul_core.1} parent=1 // pred_region
      %s15 = ssub.s32 1024, 1024
      %16 = vsyncadd [#allocation4], %s15
      %s17 = sshll.u32 [#allocation3], 4
      %s18 = int_to_ptr.vmem [resolvable:$true] %s17
      %23 = dma.hbm_to_vmem [thread:$0]  %s1, 1024, %s18, [#allocation4], 128, 128, 8
    $region9: #{_matmul_core.1} parent=1 // pred_fallthru
      _
    // Predicated region
    $region10: #{_matmul_core.1} parent=1 // pred_check
      _
    $region11: #{_matmul_core.1} parent=1 // pred_check_branch
      %25 = sbr.rel (0) target = $region13
    $region12: #{_matmul_core.1} parent=1 // pred_region
      _
    $region13: #{_matmul_core.1} parent=1 // pred_fallthru
      _
    // Predicated region
    $region14: #{_matmul_core.1} parent=1 // pred_check
      _
    $region15: #{_matmul_core.1} parent=1 // pred_check_branch
      %27 = sbr.rel (0) target = $region17
    $region16: #{_matmul_core.1} parent=1 // pred_region
      %28 = dma.done [#allocation4], 1024
    $region17: #{_matmul_core.1} parent=1 // pred_fallthru
      _
    %p30 = scmp.eq.s32.totalorder 0, 0
    // Predicated region
    $region18: #{_matmul_core.1} parent=1 // pred_check
      %p31 = pneg %p30
    $region19: #{_matmul_core.1} parent=1 // pred_check_branch
      %33 = sbr.rel (%p31) target = $region21
    $region20: #{_matmul_core.1} parent=1 // pred_region
      %34 = vst [vmem:[#allocation2] sm:$0xf] 0.0
    $region21: #{_matmul_core.1} parent=1 // pred_fallthru
      _
    %v35 = vld [vmem:[#allocation2] sm:$0xf]
    %v36 = vld [vmem:[%s0] sm:$0x1]
    %v37 = vld [vmem:[#allocation3] sm:$0xff]
    %v38 = vld [vmem:[#allocation3 + $0x8] sm:$0xff]
    %v39 = vld [vmem:[#allocation3 + $0x10] sm:$0xff]
    %v40 = vld [vmem:[#allocation3 + $0x18] sm:$0xff]
    %v41 = vld [vmem:[#allocation3 + $0x20] sm:$0xff]
    %v42 = vld [vmem:[#allocation3 + $0x28] sm:$0xff]
    %v43 = vld [vmem:[#allocation3 + $0x30] sm:$0xff]
    %v44 = vld [vmem:[#allocation3 + $0x38] sm:$0xff]
    %v53 = vunpack.c.l.b16 %v37
    %v54 = vunpack.c.h.b16 %v37
    %v55 = vunpack.c.l.b16 %v38
    %v56 = vunpack.c.h.b16 %v38
    %v57 = vunpack.c.l.b16 %v39
    %v58 = vunpack.c.h.b16 %v39
    %v59 = vunpack.c.l.b16 %v40
    %v60 = vunpack.c.h.b16 %v40
    %v61 = vunpack.c.l.b16 %v41
    %v62 = vunpack.c.h.b16 %v41
    %v63 = vunpack.c.l.b16 %v42
    %v64 = vunpack.c.h.b16 %v42
    %v65 = vunpack.c.l.b16 %v43
    %v66 = vunpack.c.h.b16 %v43
    %v67 = vunpack.c.l.b16 %v44
    %v68 = vunpack.c.h.b16 %v44
    %v69 = vpack.c.b16 %v55, %v53
    %v70 = vpack.c.b16 %v56, %v54
    %v71 = vpack.c.b16 %v59, %v57
    %v72 = vpack.c.b16 %v60, %v58
    %v73 = vpack.c.b16 %v63, %v61
    %v74 = vpack.c.b16 %v64, %v62
    %v75 = vpack.c.b16 %v67, %v65
    %v76 = vpack.c.b16 %v68, %v66
    %vm85 = vcmask 523264
    %v87 = vsel %vm85, %v36, 0
    %89 = vmatprep.subr.bf16.mxu0 %v70
    %90 = vmatpush1.bf16.msra.mxu0 %v69
    %91 = vmatprep.subr.bf16.mxu0 %v72
    %92 = vmatpush1.bf16.msra.mxu0 %v71
    %93 = vmatprep.subr.bf16.mxu0 %v74
    %94 = vmatpush1.bf16.msra.mxu0 %v73
    %95 = vmatprep.subr.bf16.mxu0 %v76
    %96 = vmatpush1.bf16.msra.mxu0 %v75
    %97 = vmatprep.subr.bf16.mxu0 0
    %98 = vmatpush1.bf16.msra.mxu0 0
    %99 = vmatprep.subr.bf16.mxu0 0
    %100 = vmatpush1.bf16.msra.mxu0 0
    %101 = vmatprep.subr.bf16.mxu0 0
    %102 = vmatpush1.bf16.msra.mxu0 0
    %103 = vmatprep.subr.bf16.mxu0 0
    %104 = vmatpush1.bf16.msra.mxu0 0
    %105 = vmatprep.subr.bf16.mxu0 0
    %106 = vmatpush1.bf16.msra.mxu0 0
    %107 = vmatprep.subr.bf16.mxu0 0
    %108 = vmatpush1.bf16.msra.mxu0 0
    %109 = vmatprep.subr.bf16.mxu0 0
    %110 = vmatpush1.bf16.msra.mxu0 0
    %111 = vmatprep.subr.bf16.mxu0 0
    %112 = vmatpush1.bf16.msra.mxu0 0
    %113 = vmatprep.subr.bf16.mxu0 0
    %114 = vmatpush1.bf16.msra.mxu0 0
    %115 = vmatprep.subr.bf16.mxu0 0
    %116 = vmatpush1.bf16.msra.mxu0 0
    %117 = vmatprep.subr.bf16.mxu0 0
    %118 = vmatpush1.bf16.msra.mxu0 0
    %119 = vmatprep.subr.bf16.mxu0 0
    %120 = vmatpush1.bf16.msra.mxu0 0
    %121 = vmatprep.mubr.bf16.mxu0 0
    %122 = vmatmul.mubr.bf16.gmra.mrb[0].mxu0 %v87
    %v123 = vpop.f32.mrb[0].mxu0
    %v124 = vadd.f32 0.0, %v123
    %v125 = vpop.f32.mrb[0].mxu0
    %v126 = vadd.f32 0.0, %v125
    %v127 = vpop.f32.mrb[0].mxu0
    %v128 = vpop.f32.mrb[0].mxu0
    %129 = vdwg.mxu0
    %v132 = vcombine.low %v124, %v126
    %v134 = vunpack.c.l.s4 1983009808
    %v135 = vunpack.c.0.s8 %v134
    %v136 = vlaneseq
    %v137 = vshrl.u32 %v136, 7
    %v138 = vsub.s32 %v135, %v137
    %v139 = vrot.slane %v132, %v138
    %v141 = vadd.f32 %v35, %v139
    %142 = vst [vmem:[#allocation2] sm:$0xf] %v141
    // Predicated region
    $region22: #{_matmul_core.1} parent=1 // pred_check
      %p143 = pneg %p30
    $region23: #{_matmul_core.1} parent=1 // pred_check_branch
      %145 = sbr.rel (%p143) target = $region25
    $region24: #{_matmul_core.1} parent=1 // pred_region
      %v146 = vld [vmem:[#allocation2] sm:$0xf]
      %v147 = vld [vmem:[%s2] sm:$0x3]
      %v149 = vlaneseq
      %v150 = vshrl.u32 %v149, 7
      %v151 = vsub.s32 0, %v150
      %v152 = vrot.slane %v147, %v151
      %v153 = vlaneseq
      %v154 = vshrl.u32 %v153, 7
      %v155 = vsub.s32 1, %v154
      %v156 = vrot.slane %v147, %v155
      %v157 = vcombine.low %v152, %v156
      %v159 = vunpack.c.l.s4 1983009808
      %v160 = vunpack.c.0.s8 %v159
      %v161 = vlaneseq
      %v162 = vshrl.u32 %v161, 7
      %v163 = vsub.s32 %v160, %v162
      %v164 = vrot.slane %v157, %v163
      %v166 = vadd.f32 %v146, %v164
      %v167 = vxor.u32 %v166, 2147483648
      %v168 = vmul.f32 %v167, 1.442695
      %v169 = vpow.pop %v168
      %v170 = vadd.f32 %v169, 1.0
      %v171 = vrcp.pop %v170
      %v172 = vmul.f32 1.0, %v171
      %v173 = vmul.f32 %v166, %v172
      %v176 = vunpack.c.l.s4 1983009808
      %v177 = vunpack.c.0.s8 %v176
      %v178 = vlaneseq
      %v179 = vshrl.u32 %v178, 7
      %v180 = vsub.s32 %v177, %v179
      %v181 = vrot.slane %v173, %v180
      %v182 = vcombine.high %v181, %v181
      %v185 = vpack.c.bf16 %v181, %v181
      %v186 = vpack.c.bf16 %v182, %v182
      %v189 = vcombine.low %v185, %v186
      %v191 = vunpack.c.l.s4 1966171168
      %v192 = vunpack.c.0.s8 %v191
      %v193 = vlaneseq
      %v194 = vshrl.u32 %v193, 7
      %v195 = vsub.s32 %v192, %v194
      %v196 = vrot.slane %v189, %v195
      %v198 = vunpack.c.l.s4 1966171168
      %v199 = vunpack.c.0.s8 %v198
      %v200 = vlaneseq
      %v201 = vshrl.u32 %v200, 7
      %v202 = vsub.s32 %v199, %v201
      %v203 = vrot.slane %v196, %v202
      %205 = vst [vmem:[#allocation6] sm:$0x3] %v203
    $region25: #{_matmul_core.1} parent=1 // pred_fallthru
      _
    // Predicated region
    $region26: #{_matmul_core.1} parent=1 // pred_check
      _
    $region27: #{_matmul_core.1} parent=1 // pred_check_branch
      %207 = sbr.rel (0) target = $region29
    $region28: #{_matmul_core.1} parent=1 // pred_region
      %s209 = ssub.s32 32, 32
      %210 = vsyncadd [#allocation5], %s209
      %s212 = sshll.u32 [#allocation6], 4
      %s213 = int_to_ptr.vmem [resolvable:$true] %s212
      %215 = dma.vmem_to_hbm [thread:$0]  %s213, 32, %s3, [#allocation5]
    $region29: #{_matmul_core.1} parent=1 // pred_fallthru
      _
    // Predicated region
    $region30: #{_matmul_core.1} parent=1 // pred_check
      _
    $region31: #{_matmul_core.1} parent=1 // pred_check_branch
      %217 = sbr.rel (0) target = $region33
    $region32: #{_matmul_core.1} parent=1 // pred_region
      %218 = dma.done [#allocation5], 32
    $region33: #{_matmul_core.1} parent=1 // pred_fallthru
      _
    %219 = vsyncpa [#allocation4], 1
    %220 = vsyncpa [#allocation5], 1

</llo_original>
